<compile_context>
chip_gen: v7x
topology: tpu7x:2x2x1
jax: 0.10.0
libtpu: 0.0.40
codegen_flags: <defaults>
</compile_context>

<pallas_src>
import functools

import jax
import jax.numpy as jnp
from jax.experimental import pallas as pl
from jax.experimental.pallas import tpu as pltpu


def _cdiv(a, b):
    return (a + b - 1) // b


def _round_up(a, b):
    return _cdiv(a, b) * b


def _frn_kernel(p_ref, x_ref, o_ref, *, eps, inv_hw):
    # p_ref: (tr, 3) f32 columns [gamma, beta, tau]; x_ref/o_ref: (tr, hw).
    p = p_ref[...]
    g = p[:, 0:1]
    b = p[:, 1:2]
    t = p[:, 2:3]

    # Mean of squares over the true spatial extent.  The block's minor dim is
    # the full (possibly non-128-aligned) hw, so the reduction only sees the
    # logical elements; dividing by the true H*W keeps the statistic exact.
    x0 = x_ref[...].astype(jnp.float32)
    nu2 = jnp.sum(x0 * x0, axis=-1, keepdims=True) * inv_hw        # (tr, 1)

    # Fold gamma into the rsqrt scale: y = max(x * (g*rsqrt(nu2+eps)) + b, t).
    scale = g * jax.lax.rsqrt(nu2 + eps)                           # (tr, 1)

    # Separate re-read/convert instead of reusing x0 (avoids a full-tile f32
    # temporary staying live across the reduce-then-normalize pattern).
    x1 = x_ref[...].astype(jnp.float32)
    o_ref[...] = jnp.maximum(x1 * scale + b, t).astype(o_ref.dtype)


def filter_response_norm(x, gamma, beta, tau, eps=1e-6):
    """x: (N, C, H, W); gamma/beta/tau: (1, C, 1, 1). Returns (N, C, H, W)."""
    n, c, h, w = x.shape
    nc, hw = n * c, h * w
    dtype = x.dtype
    itemsize = jnp.dtype(dtype).itemsize

    sub = max(8, 32 // itemsize)          # sublane granularity: 8 f32, 16 bf16
    lane = 128

    # --- VMEM footprint model (lane-padded, honest) ------------------------
    hw_row_bytes = _round_up(hw, lane) * itemsize       # one row of x / out
    param_row_bytes = lane * 4                          # (tr, 3) f32 pads to 128 lanes
    temp_row_bytes = _round_up(hw, lane) * 4 if itemsize < 4 else 0

    try:
        vmem_cap = int(pltpu.get_tpu_info().vmem_capacity_bytes)
    except Exception:
        vmem_cap = 64 * 1024 * 1024       # conservative: v7x per-TensorCore
    budget = vmem_cap - 4 * 1024 * 1024   # headroom for compiler internals

    # 2x-in + 2x-out double buffers + 2x param buffers + f32 temp margin.
    per_row_vmem = 4 * hw_row_bytes + 2 * param_row_bytes + temp_row_bytes
    tr_max = max(sub, (budget // per_row_vmem) // sub * sub)
    # TODO(synk): add a spatial-tiled two-pass variant for feature maps so
    # large that even an (8, hw) block exceeds VMEM; for now the limit is
    # capped at the physical capacity.

    # --- Row-tile / grid selection -----------------------------------------
    # ~2 MiB blocks already saturate HBM on v5e/v6e/v7x; keep >= 4 pipelined
    # steps when the row count allows and an even count for v7x's 2 TCs.
    target_block_bytes = 2 * 1024 * 1024
    tr_target = max(sub, (target_block_bytes // hw_row_bytes) // sub * sub)
    tr_target = min(tr_target, tr_max)

    max_steps = _cdiv(nc, sub)
    steps = _cdiv(nc, tr_target)
    steps = max(steps, min(4, max_steps))
    if steps % 2 and steps < max_steps:
        steps += 1
    tr = min(tr_max, _round_up(_cdiv(nc, steps), sub))
    grid_rows = _cdiv(nc, tr)

    vmem_limit = (4 * tr * hw_row_bytes + 2 * tr * param_row_bytes
                  + tr * temp_row_bytes + 4 * 1024 * 1024)
    vmem_limit = min(max(int(vmem_limit), 16 * 1024 * 1024), vmem_cap)

    # --- Glue (no HBM copies: x reshape is free, params are tiny) ----------
    x2d = x.reshape(nc, hw)
    params = jnp.tile(
        jnp.stack(
            [gamma.reshape(c), beta.reshape(c), tau.reshape(c)], axis=-1
        ).astype(jnp.float32),
        (n, 1),
    )                                                    # (nc, 3)

    kernel = functools.partial(
        _frn_kernel, eps=abs(float(eps)), inv_hw=1.0 / float(hw)
    )

    out2d = pl.pallas_call(
        kernel,
        out_shape=jax.ShapeDtypeStruct((nc, hw), dtype),
        grid_spec=pltpu.PrefetchScalarGridSpec(
            num_scalar_prefetch=0,
            grid=(grid_rows,),
            in_specs=[
                pl.BlockSpec((tr, 3), lambda i: (i, 0)),    # [gamma|beta|tau]
                pl.BlockSpec((tr, hw), lambda i: (i, 0)),   # x row tile
            ],
            out_specs=pl.BlockSpec((tr, hw), lambda i: (i, 0)),
        ),
        compiler_params=pltpu.CompilerParams(
            dimension_semantics=("parallel",),
            vmem_limit_bytes=int(vmem_limit),
        ),
    )(params, x2d)

    return out2d.reshape(n, c, h, w)


def _reference_frn(x, gamma, beta, tau, eps=1e-6):
    nu2 = jnp.mean(jnp.square(x), axis=(2, 3), keepdims=True)
    x_n = x * jax.lax.rsqrt(nu2 + abs(eps))
    return jnp.maximum(gamma * x_n + beta, tau)


if __name__ == "__main__":
    key = jax.random.PRNGKey(0)
    k_x, k_g, k_b, k_t = jax.random.split(key, 4)

    # Main check: shapes consistent with the module.
    N, C, H, W = 2, 4, 16, 16
    x = jax.random.normal(k_x, (N, C, H, W), dtype=jnp.float32)
    gamma = jax.random.normal(k_g, (1, C, 1, 1), dtype=jnp.float32)
    beta = jax.random.normal(k_b, (1, C, 1, 1), dtype=jnp.float32)
    tau = jax.random.normal(k_t, (1, C, 1, 1), dtype=jnp.float32)

    out = filter_response_norm(x, gamma, beta, tau)
    jax.block_until_ready(out)
    ref = _reference_frn(x, gamma, beta, tau)
    assert out.shape == (N, C, H, W)
    assert jnp.allclose(out, ref, atol=1e-5, rtol=1e-5), "mismatch vs reference"

    # Secondary check: non-aligned H*W and N*C exercise partial-block handling
    # (no wrapper-side padding / slicing anymore).
    N2, C2, H2, W2 = 2, 3, 5, 7
    x2 = jax.random.normal(k_x, (N2, C2, H2, W2), dtype=jnp.float32)
    g2 = jax.random.normal(k_g, (1, C2, 1, 1), dtype=jnp.float32)
    b2 = jax.random.normal(k_b, (1, C2, 1, 1), dtype=jnp.float32)
    t2 = jax.random.normal(k_t, (1, C2, 1, 1), dtype=jnp.float32)
    out2 = filter_response_norm(x2, g2, b2, t2)
    jax.block_until_ready(out2)
    ref2 = _reference_frn(x2, g2, b2, t2)
    assert jnp.allclose(out2, ref2, atol=1e-5, rtol=1e-5), "mismatch (unaligned case)"

    print("KERNEL_OK")
</pallas_src>

<mosaic_0001>
module attributes {stable_mosaic.version = 11 : i64} {
  func.func @_frn_kernel(%arg0: i32, %arg1: memref<8x3xf32, #tpu.memory_space<vmem>>, %arg2: memref<8x256xf32, #tpu.memory_space<vmem>>, %arg3: memref<8x256xf32, #tpu.memory_space<vmem>>) attributes {dimension_semantics = [#tpu.dimension_semantics<parallel>], iteration_bounds = array<i64: 1>, scalar_prefetch = 0 : i64, scratch_operands = 0 : i64, tpu.core_type = #tpu.core_type<tc>, window_params = [{transform_indices = @transform_0, window_bounds = array<i64: 8, 3>}, {transform_indices = @transform_1, window_bounds = array<i64: 8, 256>}, {transform_indices = @transform_2, window_bounds = array<i64: 8, 256>}]} {
    %c0 = arith.constant 0 : index
    %c0_0 = arith.constant 0 : index
    %0 = vector.load %arg1[%c0, %c0_0] : memref<8x3xf32, #tpu.memory_space<vmem>>, vector<8x3xf32>
    %1 = vector.extract_strided_slice %0 {offsets = [0, 0], sizes = [8, 1], strides = [1, 1]} : vector<8x3xf32> to vector<8x1xf32>
    %2 = vector.extract_strided_slice %0 {offsets = [0, 1], sizes = [8, 1], strides = [1, 1]} : vector<8x3xf32> to vector<8x1xf32>
    %3 = vector.extract_strided_slice %0 {offsets = [0, 2], sizes = [8, 1], strides = [1, 1]} : vector<8x3xf32> to vector<8x1xf32>
    %c0_1 = arith.constant 0 : index
    %c0_2 = arith.constant 0 : index
    %4 = vector.load %arg2[%c0_1, %c0_2] : memref<8x256xf32, #tpu.memory_space<vmem>>, vector<8x256xf32>
    %5 = arith.mulf %4, %4 : vector<8x256xf32>
    %cst = arith.constant dense<0.000000e+00> : vector<8xf32>
    %6 = vector.multi_reduction <add>, %5, %cst [1] : vector<8x256xf32> to vector<8xf32>
    %7 = vector.shape_cast %6 : vector<8xf32> to vector<8x1xf32>
    %cst_3 = arith.constant 3.906250e-03 : f32
    %8 = vector.broadcast %cst_3 : f32 to vector<8x1xf32>
    %9 = arith.mulf %7, %8 : vector<8x1xf32>
    %cst_4 = arith.constant 9.99999997E-7 : f32
    %10 = vector.broadcast %cst_4 : f32 to vector<8x1xf32>
    %11 = arith.addf %9, %10 : vector<8x1xf32>
    %12 = math.rsqrt %11 : vector<8x1xf32>
    %13 = arith.mulf %1, %12 : vector<8x1xf32>
    %c0_5 = arith.constant 0 : index
    %c0_6 = arith.constant 0 : index
    %14 = vector.load %arg2[%c0_5, %c0_6] : memref<8x256xf32, #tpu.memory_space<vmem>>, vector<8x256xf32>
    %15 = vector.broadcast %13 : vector<8x1xf32> to vector<8x256xf32>
    %16 = arith.mulf %14, %15 : vector<8x256xf32>
    %17 = vector.broadcast %2 : vector<8x1xf32> to vector<8x256xf32>
    %18 = arith.addf %16, %17 : vector<8x256xf32>
    %19 = vector.broadcast %3 : vector<8x1xf32> to vector<8x256xf32>
    %20 = arith.maximumf %18, %19 : vector<8x256xf32>
    %c0_7 = arith.constant 0 : index
    %c0_8 = arith.constant 0 : index
    %21 = vector.load %arg3[%c0_7, %c0_8] : memref<8x256xf32, #tpu.memory_space<vmem>>, vector<8x256xf32>
    tpu.vector_store %arg3[%c0_7, %c0_8], %20 {strides = array<i32>} : memref<8x256xf32, #tpu.memory_space<vmem>>, vector<8x256xf32>,
    return
  }
  func.func @transform_0(%arg0: i32) -> (i32, i32) {
    %c0_i32 = arith.constant 0 : i32
    %c0_i32_0 = arith.constant 0 : i32
    return %arg0, %c0_i32 : i32, i32
  }
  func.func @transform_1(%arg0: i32) -> (i32, i32) {
    %c0_i32 = arith.constant 0 : i32
    %c0_i32_0 = arith.constant 0 : i32
    return %arg0, %c0_i32 : i32, i32
  }
  func.func @transform_2(%arg0: i32) -> (i32, i32) {
    %c0_i32 = arith.constant 0 : i32
    %c0_i32_0 = arith.constant 0 : i32
    return %arg0, %c0_i32 : i32, i32
  }
}

</mosaic_0001>

<llo_original>
// kernel: tpu_custom_call.1
$region0: #{tpu_custom_call.1}
  #allocation0 [shape = 'u32[]', space=smem, size = 0x4, offset = 0x4, fixed_abs, tag = 'smem constant byte address 0x4 - core index']
  #allocation1 [shape = 'u32[144,128]{1,0:T(1,128)}', space=vmem, size = 0x12000, scoped, tag = 'internal scratch']
  %s0 = inlined_call_operand.vmem [shape: f32[8,3], index: 0, kind: input, shape index: {}]
  %s1 = inlined_call_operand.hbm [shape: f32[8,256], index: 1, kind: input, shape index: {}]
  %s2 = inlined_call_operand.hbm [shape: f32[8,256], index: 2, kind: output, shape index: {}]
  %s3 = sld [smem:[#allocation0]]
  $region22: #{tpu_custom_call.1} parent=0
    _
  %s5 = ssub.s32 1, %s3
  %s6 = scalar_select 0, %s5, %s3
  $region1: #{tpu_custom_call.1} parent=0
    #allocation2 [shape = 'u8[8192]{0}', space=vmem, size = 0x2000, scoped, tag = 'input window, operand 1, single buffered']
    #allocation3 [shape = 's32[1]{0}', space=sflag, size = 0x4, scoped, tag = 'scoped memory for tpu_custom_call.1']
    #allocation4 [shape = 's32[1]{0}', space=sflag, size = 0x4, scoped, tag = 'scoped memory for tpu_custom_call.1']
    #allocation5 [shape = 'u8[8192]{0}', space=vmem, size = 0x2000, scoped, tag = 'output window, operand 0, single buffered']
    %7 = vsyncpa [#allocation3], 0
    %8 = vsyncpa [#allocation4], 0
    // Predicated region
    $region2: #{tpu_custom_call.1} parent=1 // pred_check
      _
    $region3: #{tpu_custom_call.1} parent=1 // pred_check_branch
      %10 = sbr.rel (0) target = $region5
    $region4: #{tpu_custom_call.1} parent=1 // pred_region
      _
    $region5: #{tpu_custom_call.1} parent=1 // pred_fallthru
      _
    // Predicated region
    $region6: #{tpu_custom_call.1} parent=1 // pred_check
      _
    $region7: #{tpu_custom_call.1} parent=1 // pred_check_branch
      %12 = sbr.rel (0) target = $region9
    $region8: #{tpu_custom_call.1} parent=1 // pred_region
      %s14 = ssub.s32 256, 256
      %15 = vsyncadd [#allocation3], %s14
      %s17 = sshll.u32 [#allocation2], 4
      %s18 = int_to_ptr.vmem [resolvable:$true] %s17
      %20 = dma.hbm_to_vmem [thread:$0]  %s1, 256, %s18, [#allocation3]
    $region9: #{tpu_custom_call.1} parent=1 // pred_fallthru
      _
    // Predicated region
    $region10: #{tpu_custom_call.1} parent=1 // pred_check
      _
    $region11: #{tpu_custom_call.1} parent=1 // pred_check_branch
      %22 = sbr.rel (0) target = $region13
    $region12: #{tpu_custom_call.1} parent=1 // pred_region
      %23 = dma.done [#allocation3], 256
    $region13: #{tpu_custom_call.1} parent=1 // pred_fallthru
      _
    %v24 = vld [vmem:[%s0] sm:$0xff]
    %v25 = vld [vmem:[#allocation2] sm:$0xff]
    %v26 = vld [vmem:[#allocation2 + $0x8] sm:$0xff]
    %v27 = vmul.f32 %v25, %v25
    %v28 = vmul.f32 %v26, %v26
    %v29 = vadd.f32 %v27, %v28
    %30 = vadd.xlane.f32.xlu0 %v29
    %v31 = vpop.xlane.xlu0 %30
    %v32 = vmul.f32 %v31, 0.00390625
    %v33 = vadd.f32 %v32, 1e-06
    %v34 = vrsqrt.pop %v33
    %v35 = vmul.f32 %v24, %v34
    %37 = vset.pattern.permute.xlu0 0
    %38 = vperm.xlu0 %37, %v35
    %v39 = vpop.permute.xlu0 %38
    %v41 = vmul.f32 %v25, %v39
    %v42 = vmul.f32 %v26, %v39
    %44 = vset.pattern.permute.xlu0 1
    %45 = vperm.xlu0 %44, %v24
    %v46 = vpop.permute.xlu0 %45
    %v48 = vadd.f32 %v41, %v46
    %v49 = vadd.f32 %v42, %v46
    %50 = vset.pattern.permute.xlu0 2
    %51 = vperm.xlu0 %50, %v24
    %v52 = vpop.permute.xlu0 %51
    %v54 = vmax.f32 %v48, %v52
    %v55 = vmax.f32 %v49, %v52
    %56 = vst [vmem:[#allocation5] sm:$0xff] %v54
    %57 = vst [vmem:[#allocation5 + $0x8] sm:$0xff] %v55
    // Predicated region
    $region14: #{tpu_custom_call.1} parent=1 // pred_check
      _
    $region15: #{tpu_custom_call.1} parent=1 // pred_check_branch
      %59 = sbr.rel (0) target = $region17
    $region16: #{tpu_custom_call.1} parent=1 // pred_region
      %s61 = ssub.s32 256, 256
      %62 = vsyncadd [#allocation4], %s61
      %s64 = sshll.u32 [#allocation5], 4
      %s65 = int_to_ptr.vmem [resolvable:$true] %s64
      %67 = dma.vmem_to_hbm [thread:$0]  %s65, 256, %s2, [#allocation4]
    $region17: #{tpu_custom_call.1} parent=1 // pred_fallthru
      _
    // Predicated region
    $region18: #{tpu_custom_call.1} parent=1 // pred_check
      _
    $region19: #{tpu_custom_call.1} parent=1 // pred_check_branch
      %69 = sbr.rel (0) target = $region21
    $region20: #{tpu_custom_call.1} parent=1 // pred_region
      %70 = dma.done [#allocation4], 256
    $region21: #{tpu_custom_call.1} parent=1 // pred_fallthru
      _
    %71 = vsyncpa [#allocation3], 1
    %72 = vsyncpa [#allocation4], 1

</llo_original>
